<compile_context>
chip_gen: v5e
topology: v5e:2x2
jax: 0.10.0
libtpu: 0.0.40
codegen_flags: <defaults>
</compile_context>

<pallas_src>
import functools

import jax
import jax.numpy as jnp
from jax.experimental import pallas as pl
from jax.experimental.pallas import tpu as pltpu


def _cdiv(a, b):
    return (a + b - 1) // b


def _tensorcores_per_device():
    """Best-effort TensorCore count per JAX device.

    v7x exposes 2 TensorCores per chip (need >=2 parallel grid steps to use
    both); v5e/v6e have 1.  Heuristic only: a miss costs a little parallelism,
    never correctness."""
    try:
        kind = str(jax.devices()[0].device_kind).lower()
    except Exception:
        return 1
    if "v7" in kind:
        return 2
    return 1


# ----------------------------- Pallas kernel ------------------------------

def _ffn_fused_kernel(x_ref, *refs, relus, bb, head_slices):
    """Fused multi-layer, multi-head FFN on one batch tile (NCL layout).

      x_ref:                (bb, C_in, L)  f32 input tile (lanes = L)
      refs[:2*n_layers]:    per layer (W, shift):
          W_i: (c_out_i, c_in_i) bf16 fused weight (BN scale pre-folded)
          s_i: (c_out_i, 1)      f32  fused shift (BN shift / conv bias)
      refs[2*n_layers:]:    per-head outputs o_h: (bb, classes_h, L) f32
    Hidden activations stay in vregs/VMEM; only final per-head rows are stored
    (lane-dense along L).
    """
    num_layers = len(relus)
    param_refs = refs[: 2 * num_layers]
    out_refs = refs[2 * num_layers:]

    ws = [param_refs[2 * i][...] for i in range(num_layers)]        # bf16
    ss = [param_refs[2 * i + 1][...] for i in range(num_layers)]    # f32

    for b in range(bb):                       # static unroll, bb is small (<=8)
        h = x_ref[b].astype(jnp.bfloat16)     # (C_in, L) lanes = L
        y = None
        for i in range(num_layers):
            y = jnp.dot(ws[i], h, preferred_element_type=jnp.float32) + ss[i]
            if relus[i]:
                y = jnp.maximum(y, 0.0)
            if i < num_layers - 1:
                h = y.astype(jnp.bfloat16)
        for o_ref, (off, size) in zip(out_refs, head_slices):
            o_ref[b] = y[off:off + size].astype(o_ref.dtype)


def ffn_fused_call(x, fused_layers, head_slices, bb):
    """x: (B_pad, C, L) f32; fused_layers: [(W bf16, shift f32, relu)].
    Returns a tuple of per-head (B_pad, classes, L) f32 arrays (order follows
    head_slices)."""
    b_pad, c_in, l = x.shape
    grid = (b_pad // bb,)

    in_specs = [pl.BlockSpec((bb, c_in, l), lambda i: (i, 0, 0))]
    operands = [x]
    relus = []
    for w, s, relu in fused_layers:
        # Resident fused parameters (constant index_map -> stay in VMEM).
        # TODO(synk): pl.Buffered(1) pipeline_mode would drop the redundant
        # second buffer of these constants; negligible at these widths.
        in_specs.append(pl.BlockSpec(w.shape, lambda i: (0, 0)))
        in_specs.append(pl.BlockSpec(s.shape, lambda i: (0, 0)))
        operands += [w, s]
        relus.append(relu)

    classes = [size for _, size in head_slices]
    out_shapes = tuple(jax.ShapeDtypeStruct((b_pad, cls, l), jnp.float32)
                       for cls in classes)
    out_specs = [pl.BlockSpec((bb, cls, l), lambda i: (i, 0, 0))
                 for cls in classes]

    # Advisory cost estimate so XLA can overlap this tiny, latency-bound call.
    flops = sum(2 * b_pad * l * w.shape[0] * w.shape[1]
                for w, _, _ in fused_layers)
    weight_bytes = sum(w.size * 2 + s.size * 4 for w, s, _ in fused_layers)
    out_bytes = sum(b_pad * cls * l * 4 for cls in classes)
    bytes_accessed = x.size * 4 + weight_bytes + out_bytes

    # Derived VMEM budget (double-buffered tiles + resident weights), generous
    # headroom but always within v7x's smaller 64 MiB physical VMEM.
    per_step = bb * c_in * l * 4 + bb * sum(classes) * l * 4
    vmem_needed = 2 * (per_step + weight_bytes)
    vmem_limit = int(min(32 * 1024 * 1024,
                         max(8 * 1024 * 1024, 4 * vmem_needed)))

    kernel = functools.partial(_ffn_fused_kernel, relus=tuple(relus), bb=bb,
                               head_slices=tuple(head_slices))
    return pl.pallas_call(
        kernel,
        out_shape=out_shapes,
        grid_spec=pltpu.PrefetchScalarGridSpec(
            num_scalar_prefetch=0,
            grid=grid,
            in_specs=in_specs,
            out_specs=out_specs,
        ),
        compiler_params=pltpu.CompilerParams(
            dimension_semantics=("parallel",),
            vmem_limit_bytes=vmem_limit),
        cost_estimate=pl.CostEstimate(
            flops=int(flops), transcendentals=0,
            bytes_accessed=int(bytes_accessed)),
    )(*operands)


# ------------------------- Parameter construction -------------------------

def make_ffn_params(key, in_channels, heads, head_conv, init_bias, eps=1e-5):
    """Deterministic parameter init mirroring the module's __init__ shapes."""
    params = {}
    for head, (classes, num_conv) in heads.items():
        key, *subkeys = jax.random.split(key, 2 * num_conv + 1)
        layers = []
        c_in = in_channels
        # hidden ConvModule layers: Conv1d (no bias) + BN1d + ReLU
        for i in range(num_conv - 1):
            kw, kb = subkeys[2 * i], subkeys[2 * i + 1]
            w = jax.random.normal(kw, (head_conv, c_in), jnp.float32) * 0.05
            gamma = jnp.ones((head_conv,), jnp.float32)
            beta = jnp.zeros((head_conv,), jnp.float32)
            running_mean = jax.random.normal(kb, (head_conv,), jnp.float32) * 0.1
            running_var = jnp.ones((head_conv,), jnp.float32)
            # fold BN (eval mode) into affine scale/shift
            scale = gamma / jnp.sqrt(running_var + eps)
            shift = beta - running_mean * scale
            layers.append(dict(w=w, scale=scale, shift=shift, relu=True))
            c_in = head_conv
        # final Conv1d with bias
        kw = subkeys[2 * (num_conv - 1)]
        w = jax.random.normal(kw, (classes, c_in), jnp.float32) * 0.05
        if head == 'heatmap':
            bias = jnp.full((classes,), init_bias, jnp.float32)
        else:
            bias = jnp.zeros((classes,), jnp.float32)
        layers.append(dict(w=w, scale=jnp.ones((classes,), jnp.float32),
                           shift=bias, relu=False))
        params[head] = layers
    return params


def build_fused_layers(params, head_order, in_channels):
    """Fold BN scale into the weights and fuse every head into one weight per
    layer.  Layer 0: per-head weights stacked vertically (every head reads the
    full input); later layers: block-diagonal.  Returns
    ([(W bf16 (c_out,c_in), shift f32 (c_out,1), relu)], {head: (row_off, rows)})
    where the slice dict addresses rows of the FINAL fused output."""
    depth = len(params[head_order[0]])
    assert all(len(params[h]) == depth for h in head_order), \
        "fused kernel assumes all heads share num_conv"

    # (row offset, row count) of each head's slice in the current fused activation
    slices = {h: (0, in_channels) for h in head_order}
    fused = []
    for i in range(depth):
        c_outs = [params[h][i]['w'].shape[0] for h in head_order]
        total_out = sum(c_outs)
        cur_width = max(off + w for off, w in slices.values())
        W = jnp.zeros((total_out, cur_width), jnp.float32)
        S = jnp.zeros((total_out,), jnp.float32)
        out_off = 0
        new_slices = {}
        relu = params[head_order[0]][i]['relu']
        for h, c_out in zip(head_order, c_outs):
            layer = params[h][i]
            assert layer['relu'] == relu, "heads must share per-layer relu pattern"
            in_off, in_w = slices[h]
            # fold BN scale into the weight rows: diag(s) @ (W x) == (s[:,None]*W) x
            w_scaled = layer['w'] * layer['scale'][:, None]      # (c_out, in_w)
            W = W.at[out_off:out_off + c_out, in_off:in_off + in_w].set(w_scaled)
            S = S.at[out_off:out_off + c_out].set(layer['shift'])
            new_slices[h] = (out_off, c_out)
            out_off += c_out
        slices = new_slices
        fused.append((W.astype(jnp.bfloat16), S.reshape(-1, 1), relu))
    return fused, slices


# ------------------------------ FFN forward -------------------------------

def ffn_forward(x_ncl, params, head_order=None):
    """x_ncl: [B, C, L] (PyTorch Conv1d layout). Returns dict of [B, classes, L]."""
    b, c, l = x_ncl.shape
    if head_order is None:
        head_order = list(params.keys())

    fused, out_slices = build_fused_layers(params, head_order, c)

    # TensorCore-aware batch tiling: 1 grid step on 1-TC chips (v5e/v6e),
    # >= num_tc parallel steps on 2-TC v7x; bounded static unroll in-kernel.
    num_tc = _tensorcores_per_device()
    target_steps = max(1, min(b, num_tc))
    bb = min(_cdiv(b, target_steps), 8)
    steps = _cdiv(b, bb)
    b_pad = steps * bb
    x_in = x_ncl if b_pad == b else jnp.pad(
        x_ncl, ((0, b_pad - b), (0, 0), (0, 0)))

    head_slices = [out_slices[h] for h in head_order]
    outs = ffn_fused_call(x_in.astype(jnp.float32), fused, head_slices, bb)

    ret = {}
    for h, o in zip(head_order, outs):
        ret[h] = o if b_pad == b else o[:b]
    return ret


def ffn_forward_ref(x_ncl, params):
    """Pure-JAX f32 reference for verification (NCL layout throughout)."""
    out = {}
    for head, layers in params.items():
        h = x_ncl                                        # (B, C, L)
        for layer in layers:
            h = jnp.einsum('oc,bcl->bol', layer['w'], h)
            h = h * layer['scale'][None, :, None] + layer['shift'][None, :, None]
            if layer['relu']:
                h = jnp.maximum(h, 0.0)
        out[head] = h
    return out


# ---------------------------------- main -----------------------------------

if __name__ == "__main__":
    key = jax.random.PRNGKey(0)
    k_x, k_p = jax.random.split(key)

    # Small shapes consistent with the module (Conv1d over proposals):
    B, in_channels, L = 2, 64, 128
    head_conv = 32
    heads = {
        'heatmap': (3, 2),   # (classes, num_conv)
        'reg': (2, 2),
        'height': (1, 2),
        'dim': (3, 2),
    }
    init_bias = -2.19

    x = jax.random.normal(k_x, (B, in_channels, L), jnp.float32)
    params = make_ffn_params(k_p, in_channels, heads, head_conv, init_bias)

    out = ffn_forward(x, params)
    out = jax.tree_util.tree_map(jax.block_until_ready, out)

    ref = ffn_forward_ref(x, params)
    for head in heads:
        assert out[head].shape == (B, heads[head][0], L), head
        # bf16 matmul inputs (f32 accumulation) vs pure-f32 reference
        assert jnp.allclose(out[head], ref[head], atol=2e-2, rtol=2e-2), head

    print("KERNEL_OK")
</pallas_src>

<mosaic_0001>
module attributes {stable_mosaic.version = 11 : i64} {
  func.func @_ffn_fused_kernel(%arg0: i32, %arg1: memref<2x64x128xf32, #tpu.memory_space<vmem>>, %arg2: memref<128x64xbf16, #tpu.memory_space<vmem>>, %arg3: memref<128x1xf32, #tpu.memory_space<vmem>>, %arg4: memref<9x128xbf16, #tpu.memory_space<vmem>>, %arg5: memref<9x1xf32, #tpu.memory_space<vmem>>, %arg6: memref<2x3x128xf32, #tpu.memory_space<vmem>>, %arg7: memref<2x2x128xf32, #tpu.memory_space<vmem>>, %arg8: memref<2x1x128xf32, #tpu.memory_space<vmem>>, %arg9: memref<2x3x128xf32, #tpu.memory_space<vmem>>) attributes {dimension_semantics = [#tpu.dimension_semantics<parallel>], iteration_bounds = array<i64: 1>, scalar_prefetch = 0 : i64, scratch_operands = 0 : i64, tpu.core_type = #tpu.core_type<tc>, window_params = [{transform_indices = @transform_0, window_bounds = array<i64: 2, 64, 128>}, {pipeline_mode = #tpu.pipeline_mode<synchronous>, transform_indices = @transform_1, window_bounds = array<i64: 128, 64>}, {pipeline_mode = #tpu.pipeline_mode<synchronous>, transform_indices = @transform_2, window_bounds = array<i64: 128, 1>}, {pipeline_mode = #tpu.pipeline_mode<synchronous>, transform_indices = @transform_3, window_bounds = array<i64: 9, 128>}, {pipeline_mode = #tpu.pipeline_mode<synchronous>, transform_indices = @transform_4, window_bounds = array<i64: 9, 1>}, {transform_indices = @transform_5, window_bounds = array<i64: 2, 3, 128>}, {transform_indices = @transform_6, window_bounds = array<i64: 2, 2, 128>}, {transform_indices = @transform_7, window_bounds = array<i64: 2, 1, 128>}, {transform_indices = @transform_8, window_bounds = array<i64: 2, 3, 128>}]} {
    %c0 = arith.constant 0 : index
    %c0_0 = arith.constant 0 : index
    %0 = vector.load %arg2[%c0, %c0_0] : memref<128x64xbf16, #tpu.memory_space<vmem>>, vector<128x64xbf16>
    %c0_1 = arith.constant 0 : index
    %c0_2 = arith.constant 0 : index
    %1 = vector.load %arg4[%c0_1, %c0_2] : memref<9x128xbf16, #tpu.memory_space<vmem>>, vector<9x128xbf16>
    %c0_3 = arith.constant 0 : index
    %c0_4 = arith.constant 0 : index
    %2 = vector.load %arg3[%c0_3, %c0_4] : memref<128x1xf32, #tpu.memory_space<vmem>>, vector<128x1xf32>
    %c0_5 = arith.constant 0 : index
    %c0_6 = arith.constant 0 : index
    %3 = vector.load %arg5[%c0_5, %c0_6] : memref<9x1xf32, #tpu.memory_space<vmem>>, vector<9x1xf32>
    %c0_7 = arith.constant 0 : index
    %c0_8 = arith.constant 0 : index
    %c0_9 = arith.constant 0 : index
    %4 = vector.load %arg1[%c0_7, %c0_8, %c0_9] : memref<2x64x128xf32, #tpu.memory_space<vmem>>, vector<1x64x128xf32>
    %5 = vector.shape_cast %4 : vector<1x64x128xf32> to vector<64x128xf32>
    %6 = arith.truncf %5 : vector<64x128xf32> to vector<64x128xbf16>
    %cst = arith.constant dense<0.000000e+00> : vector<128x128xf32>
    %7 = tpu.matmul %0, %6, %cst {dimension_numbers = #tpu.dot_dimension_numbers<[1], [0], [0], [1], [0, 0, 1, 1], [], []>} : vector<128x64xbf16>, vector<64x128xbf16>, vector<128x128xf32> -> vector<128x128xf32>
    %8 = vector.broadcast %2 : vector<128x1xf32> to vector<128x128xf32>
    %9 = arith.addf %7, %8 : vector<128x128xf32>
    %cst_10 = arith.constant 0.000000e+00 : f32
    %10 = vector.broadcast %cst_10 : f32 to vector<128x128xf32>
    %11 = arith.maximumf %9, %10 : vector<128x128xf32>
    %12 = arith.truncf %11 : vector<128x128xf32> to vector<128x128xbf16>
    %cst_11 = arith.constant dense<0.000000e+00> : vector<9x128xf32>
    %13 = tpu.matmul %1, %12, %cst_11 {dimension_numbers = #tpu.dot_dimension_numbers<[1], [0], [0], [1], [0, 0, 1, 1], [], []>} : vector<9x128xbf16>, vector<128x128xbf16>, vector<9x128xf32> -> vector<9x128xf32>
    %14 = vector.broadcast %3 : vector<9x1xf32> to vector<9x128xf32>
    %15 = arith.addf %13, %14 : vector<9x128xf32>
    %16 = vector.extract_strided_slice %15 {offsets = [0, 0], sizes = [3, 128], strides = [1, 1]} : vector<9x128xf32> to vector<3x128xf32>
    %c0_12 = arith.constant 0 : index
    %c0_13 = arith.constant 0 : index
    %c0_14 = arith.constant 0 : index
    %17 = vector.load %arg6[%c0_12, %c0_13, %c0_14] : memref<2x3x128xf32, #tpu.memory_space<vmem>>, vector<1x3x128xf32>
    %18 = vector.shape_cast %17 : vector<1x3x128xf32> to vector<3x128xf32>
    %19 = vector.shape_cast %16 : vector<3x128xf32> to vector<1x3x128xf32>
    tpu.vector_store %arg6[%c0_12, %c0_13, %c0_14], %19 {strides = array<i32>} : memref<2x3x128xf32, #tpu.memory_space<vmem>>, vector<1x3x128xf32>,
    %20 = vector.extract_strided_slice %15 {offsets = [3, 0], sizes = [2, 128], strides = [1, 1]} : vector<9x128xf32> to vector<2x128xf32>
    %c0_15 = arith.constant 0 : index
    %c0_16 = arith.constant 0 : index
    %c0_17 = arith.constant 0 : index
    %21 = vector.load %arg7[%c0_15, %c0_16, %c0_17] : memref<2x2x128xf32, #tpu.memory_space<vmem>>, vector<1x2x128xf32>
    %22 = vector.shape_cast %21 : vector<1x2x128xf32> to vector<2x128xf32>
    %23 = vector.shape_cast %20 : vector<2x128xf32> to vector<1x2x128xf32>
    tpu.vector_store %arg7[%c0_15, %c0_16, %c0_17], %23 {strides = array<i32>} : memref<2x2x128xf32, #tpu.memory_space<vmem>>, vector<1x2x128xf32>,
    %24 = vector.extract_strided_slice %15 {offsets = [5, 0], sizes = [1, 128], strides = [1, 1]} : vector<9x128xf32> to vector<1x128xf32>
    %c0_18 = arith.constant 0 : index
    %c0_19 = arith.constant 0 : index
    %c0_20 = arith.constant 0 : index
    %25 = vector.load %arg8[%c0_18, %c0_19, %c0_20] : memref<2x1x128xf32, #tpu.memory_space<vmem>>, vector<1x1x128xf32>
    %26 = vector.shape_cast %25 : vector<1x1x128xf32> to vector<1x128xf32>
    %27 = vector.shape_cast %24 : vector<1x128xf32> to vector<1x1x128xf32>
    tpu.vector_store %arg8[%c0_18, %c0_19, %c0_20], %27 {strides = array<i32>} : memref<2x1x128xf32, #tpu.memory_space<vmem>>, vector<1x1x128xf32>,
    %28 = vector.extract_strided_slice %15 {offsets = [6, 0], sizes = [3, 128], strides = [1, 1]} : vector<9x128xf32> to vector<3x128xf32>
    %c0_21 = arith.constant 0 : index
    %c0_22 = arith.constant 0 : index
    %c0_23 = arith.constant 0 : index
    %29 = vector.load %arg9[%c0_21, %c0_22, %c0_23] : memref<2x3x128xf32, #tpu.memory_space<vmem>>, vector<1x3x128xf32>
    %30 = vector.shape_cast %29 : vector<1x3x128xf32> to vector<3x128xf32>
    %31 = vector.shape_cast %28 : vector<3x128xf32> to vector<1x3x128xf32>
    tpu.vector_store %arg9[%c0_21, %c0_22, %c0_23], %31 {strides = array<i32>} : memref<2x3x128xf32, #tpu.memory_space<vmem>>, vector<1x3x128xf32>,
    %c1 = arith.constant 1 : index
    %c0_24 = arith.constant 0 : index
    %c0_25 = arith.constant 0 : index
    %32 = vector.load %arg1[%c1, %c0_24, %c0_25] : memref<2x64x128xf32, #tpu.memory_space<vmem>>, vector<1x64x128xf32>
    %33 = vector.shape_cast %32 : vector<1x64x128xf32> to vector<64x128xf32>
    %34 = arith.truncf %33 : vector<64x128xf32> to vector<64x128xbf16>
    %cst_26 = arith.constant dense<0.000000e+00> : vector<128x128xf32>
    %35 = tpu.matmul %0, %34, %cst_26 {dimension_numbers = #tpu.dot_dimension_numbers<[1], [0], [0], [1], [0, 0, 1, 1], [], []>} : vector<128x64xbf16>, vector<64x128xbf16>, vector<128x128xf32> -> vector<128x128xf32>
    %36 = vector.broadcast %2 : vector<128x1xf32> to vector<128x128xf32>
    %37 = arith.addf %35, %36 : vector<128x128xf32>
    %cst_27 = arith.constant 0.000000e+00 : f32
    %38 = vector.broadcast %cst_27 : f32 to vector<128x128xf32>
    %39 = arith.maximumf %37, %38 : vector<128x128xf32>
    %40 = arith.truncf %39 : vector<128x128xf32> to vector<128x128xbf16>
    %cst_28 = arith.constant dense<0.000000e+00> : vector<9x128xf32>
    %41 = tpu.matmul %1, %40, %cst_28 {dimension_numbers = #tpu.dot_dimension_numbers<[1], [0], [0], [1], [0, 0, 1, 1], [], []>} : vector<9x128xbf16>, vector<128x128xbf16>, vector<9x128xf32> -> vector<9x128xf32>
    %42 = vector.broadcast %3 : vector<9x1xf32> to vector<9x128xf32>
    %43 = arith.addf %41, %42 : vector<9x128xf32>
    %44 = vector.extract_strided_slice %43 {offsets = [0, 0], sizes = [3, 128], strides = [1, 1]} : vector<9x128xf32> to vector<3x128xf32>
    %c1_29 = arith.constant 1 : index
    %c0_30 = arith.constant 0 : index
    %c0_31 = arith.constant 0 : index
    %45 = vector.load %arg6[%c1_29, %c0_30, %c0_31] : memref<2x3x128xf32, #tpu.memory_space<vmem>>, vector<1x3x128xf32>
    %46 = vector.shape_cast %45 : vector<1x3x128xf32> to vector<3x128xf32>
    %47 = vector.shape_cast %44 : vector<3x128xf32> to vector<1x3x128xf32>
    tpu.vector_store %arg6[%c1_29, %c0_30, %c0_31], %47 {strides = array<i32>} : memref<2x3x128xf32, #tpu.memory_space<vmem>>, vector<1x3x128xf32>,
    %48 = vector.extract_strided_slice %43 {offsets = [3, 0], sizes = [2, 128], strides = [1, 1]} : vector<9x128xf32> to vector<2x128xf32>
    %c1_32 = arith.constant 1 : index
    %c0_33 = arith.constant 0 : index
    %c0_34 = arith.constant 0 : index
    %49 = vector.load %arg7[%c1_32, %c0_33, %c0_34] : memref<2x2x128xf32, #tpu.memory_space<vmem>>, vector<1x2x128xf32>
    %50 = vector.shape_cast %49 : vector<1x2x128xf32> to vector<2x128xf32>
    %51 = vector.shape_cast %48 : vector<2x128xf32> to vector<1x2x128xf32>
    tpu.vector_store %arg7[%c1_32, %c0_33, %c0_34], %51 {strides = array<i32>} : memref<2x2x128xf32, #tpu.memory_space<vmem>>, vector<1x2x128xf32>,
    %52 = vector.extract_strided_slice %43 {offsets = [5, 0], sizes = [1, 128], strides = [1, 1]} : vector<9x128xf32> to vector<1x128xf32>
    %c1_35 = arith.constant 1 : index
    %c0_36 = arith.constant 0 : index
    %c0_37 = arith.constant 0 : index
    %53 = vector.load %arg8[%c1_35, %c0_36, %c0_37] : memref<2x1x128xf32, #tpu.memory_space<vmem>>, vector<1x1x128xf32>
    %54 = vector.shape_cast %53 : vector<1x1x128xf32> to vector<1x128xf32>
    %55 = vector.shape_cast %52 : vector<1x128xf32> to vector<1x1x128xf32>
    tpu.vector_store %arg8[%c1_35, %c0_36, %c0_37], %55 {strides = array<i32>} : memref<2x1x128xf32, #tpu.memory_space<vmem>>, vector<1x1x128xf32>,
    %56 = vector.extract_strided_slice %43 {offsets = [6, 0], sizes = [3, 128], strides = [1, 1]} : vector<9x128xf32> to vector<3x128xf32>
    %c1_38 = arith.constant 1 : index
    %c0_39 = arith.constant 0 : index
    %c0_40 = arith.constant 0 : index
    %57 = vector.load %arg9[%c1_38, %c0_39, %c0_40] : memref<2x3x128xf32, #tpu.memory_space<vmem>>, vector<1x3x128xf32>
    %58 = vector.shape_cast %57 : vector<1x3x128xf32> to vector<3x128xf32>
    %59 = vector.shape_cast %56 : vector<3x128xf32> to vector<1x3x128xf32>
    tpu.vector_store %arg9[%c1_38, %c0_39, %c0_40], %59 {strides = array<i32>} : memref<2x3x128xf32, #tpu.memory_space<vmem>>, vector<1x3x128xf32>,
    return
  }
  func.func @transform_0(%arg0: i32) -> (i32, i32, i32) {
    %c0_i32 = arith.constant 0 : i32
    %c0_i32_0 = arith.constant 0 : i32
    %c0_i32_1 = arith.constant 0 : i32
    return %arg0, %c0_i32, %c0_i32_0 : i32, i32, i32
  }
  func.func @transform_1(%arg0: i32) -> (i32, i32) {
    %c0_i32 = arith.constant 0 : i32
    %c0_i32_0 = arith.constant 0 : i32
    %c0_i32_1 = arith.constant 0 : i32
    return %c0_i32, %c0_i32_0 : i32, i32
  }
  func.func @transform_2(%arg0: i32) -> (i32, i32) {
    %c0_i32 = arith.constant 0 : i32
    %c0_i32_0 = arith.constant 0 : i32
    %c0_i32_1 = arith.constant 0 : i32
    return %c0_i32, %c0_i32_0 : i32, i32
  }
  func.func @transform_3(%arg0: i32) -> (i32, i32) {
    %c0_i32 = arith.constant 0 : i32
    %c0_i32_0 = arith.constant 0 : i32
    %c0_i32_1 = arith.constant 0 : i32
    return %c0_i32, %c0_i32_0 : i32, i32
  }
  func.func @transform_4(%arg0: i32) -> (i32, i32) {
    %c0_i32 = arith.constant 0 : i32
    %c0_i32_0 = arith.constant 0 : i32
    %c0_i32_1 = arith.constant 0 : i32
    return %c0_i32, %c0_i32_0 : i32, i32
  }
  func.func @transform_5(%arg0: i32) -> (i32, i32, i32) {
    %c0_i32 = arith.constant 0 : i32
    %c0_i32_0 = arith.constant 0 : i32
    %c0_i32_1 = arith.constant 0 : i32
    return %arg0, %c0_i32, %c0_i32_0 : i32, i32, i32
  }
  func.func @transform_6(%arg0: i32) -> (i32, i32, i32) {
    %c0_i32 = arith.constant 0 : i32
    %c0_i32_0 = arith.constant 0 : i32
    %c0_i32_1 = arith.constant 0 : i32
    return %arg0, %c0_i32, %c0_i32_0 : i32, i32, i32
  }
  func.func @transform_7(%arg0: i32) -> (i32, i32, i32) {
    %c0_i32 = arith.constant 0 : i32
    %c0_i32_0 = arith.constant 0 : i32
    %c0_i32_1 = arith.constant 0 : i32
    return %arg0, %c0_i32, %c0_i32_0 : i32, i32, i32
  }
  func.func @transform_8(%arg0: i32) -> (i32, i32, i32) {
    %c0_i32 = arith.constant 0 : i32
    %c0_i32_0 = arith.constant 0 : i32
    %c0_i32_1 = arith.constant 0 : i32
    return %arg0, %c0_i32, %c0_i32_0 : i32, i32, i32
  }
}

</mosaic_0001>

<llo_original>
// kernel: tpu_custom_call.1
$region0: #{tpu_custom_call.1}
  #allocation0 [shape = 'u32[]', space=smem, size = 0x4, offset = 0x4, fixed_abs, tag = 'smem constant byte address 0x4 - core index']
  #allocation1 [shape = 'u32[72,128]{1,0:T(1,128)}', space=vmem, size = 0x9000, scoped, tag = 'internal scratch']
  %s0 = inlined_call_operand.vmem [shape: f32[2,64,128], index: 0, kind: input, shape index: {}]
  %s1 = inlined_call_operand.vmem [shape: bf16[128,64], index: 1, kind: input, shape index: {}]
  %s2 = inlined_call_operand.vmem [shape: f32[128,1], index: 2, kind: input, shape index: {}]
  %s3 = inlined_call_operand.vmem [shape: bf16[9,128], index: 3, kind: input, shape index: {}]
  %s4 = inlined_call_operand.vmem [shape: f32[9,1], index: 4, kind: input, shape index: {}]
  %s5 = inlined_call_operand.vmem [shape: f32[2,3,128], index: 5, kind: output, shape index: {0}]
  %s6 = inlined_call_operand.hbm [shape: f32[2,2,128], index: 6, kind: output, shape index: {1}]
  %s7 = inlined_call_operand.hbm [shape: f32[2,1,128], index: 7, kind: output, shape index: {2}]
  %s8 = inlined_call_operand.vmem [shape: f32[2,3,128], index: 8, kind: output, shape index: {3}]
  %9 = xla_tuple %s5, %s6, %s7, %s8
  %s10 = sld [smem:[#allocation0]]
  $region54: #{tpu_custom_call.1} parent=0
    _
  %s12 = ssub.s32 1, %s10
  %s13 = scalar_select 0, %s12, %s10
  $region1: #{tpu_custom_call.1} parent=0
    #allocation2 [shape = 'u8[2048]{0}', space=vmem, size = 0x800, scoped, tag = 'output window, operand 1, single buffered']
    #allocation3 [shape = 's32[1]{0}', space=sflag, size = 0x4, scoped, tag = 'scoped memory for tpu_custom_call.1']
    #allocation4 [shape = 'u8[1024]{0}', space=vmem, size = 0x400, scoped, tag = 'output window, operand 2, single buffered']
    #allocation5 [shape = 's32[1]{0}', space=sflag, size = 0x4, scoped, tag = 'scoped memory for tpu_custom_call.1']
    %14 = vsyncpa [#allocation3], 0
    %15 = vsyncpa [#allocation5], 0
    // Predicated region
    $region2: #{tpu_custom_call.1} parent=1 // pred_check
      _
    $region3: #{tpu_custom_call.1} parent=1 // pred_check_branch
      %17 = sbr.rel (0) target = $region5
    $region4: #{tpu_custom_call.1} parent=1 // pred_region
      _
    $region5: #{tpu_custom_call.1} parent=1 // pred_fallthru
      _
    // Predicated region
    $region6: #{tpu_custom_call.1} parent=1 // pred_check
      _
    $region7: #{tpu_custom_call.1} parent=1 // pred_check_branch
      %19 = sbr.rel (0) target = $region9
    $region8: #{tpu_custom_call.1} parent=1 // pred_region
      _
    $region9: #{tpu_custom_call.1} parent=1 // pred_fallthru
      _
    // Predicated region
    $region10: #{tpu_custom_call.1} parent=1 // pred_check
      _
    $region11: #{tpu_custom_call.1} parent=1 // pred_check_branch
      %21 = sbr.rel (0) target = $region13
    $region12: #{tpu_custom_call.1} parent=1 // pred_region
      _
    $region13: #{tpu_custom_call.1} parent=1 // pred_fallthru
      _
    // Predicated region
    $region14: #{tpu_custom_call.1} parent=1 // pred_check
      _
    $region15: #{tpu_custom_call.1} parent=1 // pred_check_branch
      %23 = sbr.rel (0) target = $region17
    $region16: #{tpu_custom_call.1} parent=1 // pred_region
      _
    $region17: #{tpu_custom_call.1} parent=1 // pred_fallthru
      _
    // Predicated region
    $region18: #{tpu_custom_call.1} parent=1 // pred_check
      _
    $region19: #{tpu_custom_call.1} parent=1 // pred_check_branch
      %25 = sbr.rel (0) target = $region21
    $region20: #{tpu_custom_call.1} parent=1 // pred_region
      _
    $region21: #{tpu_custom_call.1} parent=1 // pred_fallthru
      _
    %v27 = vld [vmem:[%s1] sm:$0xf]
    %v28 = vld [vmem:[%s1 + $0x4] sm:$0xf]
    %v29 = vld [vmem:[%s1 + $0x8] sm:$0xf]
    %v30 = vld [vmem:[%s1 + $0xc] sm:$0xf]
    %v31 = vld [vmem:[%s1 + $0x10] sm:$0xf]
    %v32 = vld [vmem:[%s1 + $0x14] sm:$0xf]
    %v33 = vld [vmem:[%s1 + $0x18] sm:$0xf]
    %v34 = vld [vmem:[%s1 + $0x1c] sm:$0xf]
    %v35 = vld [vmem:[%s1 + $0x20] sm:$0xf]
    %v36 = vld [vmem:[%s1 + $0x24] sm:$0xf]
    %v37 = vld [vmem:[%s1 + $0x28] sm:$0xf]
    %v38 = vld [vmem:[%s1 + $0x2c] sm:$0xf]
    %v39 = vld [vmem:[%s1 + $0x30] sm:$0xf]
    %v40 = vld [vmem:[%s1 + $0x34] sm:$0xf]
    %v41 = vld [vmem:[%s1 + $0x38] sm:$0xf]
    %v42 = vld [vmem:[%s1 + $0x3c] sm:$0xf]
    %v43 = vld [vmem:[%s3] sm:$0xf]
    %v44 = vld [vmem:[%s3 + $0x4] sm:$0x1]
    %v45 = vld [vmem:[%s2] sm:$0xff]
    %v46 = vld [vmem:[%s2 + $0x8] sm:$0xff]
    %v47 = vld [vmem:[%s2 + $0x10] sm:$0xff]
    %v48 = vld [vmem:[%s2 + $0x18] sm:$0xff]
    %v49 = vld [vmem:[%s2 + $0x20] sm:$0xff]
    %v50 = vld [vmem:[%s2 + $0x28] sm:$0xff]
    %v51 = vld [vmem:[%s2 + $0x30] sm:$0xff]
    %v52 = vld [vmem:[%s2 + $0x38] sm:$0xff]
    %v53 = vld [vmem:[%s2 + $0x40] sm:$0xff]
    %v54 = vld [vmem:[%s2 + $0x48] sm:$0xff]
    %v55 = vld [vmem:[%s2 + $0x50] sm:$0xff]
    %v56 = vld [vmem:[%s2 + $0x58] sm:$0xff]
    %v57 = vld [vmem:[%s2 + $0x60] sm:$0xff]
    %v58 = vld [vmem:[%s2 + $0x68] sm:$0xff]
    %v59 = vld [vmem:[%s2 + $0x70] sm:$0xff]
    %v60 = vld [vmem:[%s2 + $0x78] sm:$0xff]
    %v61 = vld [vmem:[%s4] sm:$0xff]
    %v62 = vld [vmem:[%s4 + $0x8] sm:$0x1]
    %v63 = vld [vmem:[%s0] sm:$0xff]
    %v64 = vld [vmem:[%s0 + $0x8] sm:$0xff]
    %v65 = vld [vmem:[%s0 + $0x10] sm:$0xff]
    %v66 = vld [vmem:[%s0 + $0x18] sm:$0xff]
    %v67 = vld [vmem:[%s0 + $0x20] sm:$0xff]
    %v68 = vld [vmem:[%s0 + $0x28] sm:$0xff]
    %v69 = vld [vmem:[%s0 + $0x30] sm:$0xff]
    %v70 = vld [vmem:[%s0 + $0x38] sm:$0xff]
    %v71 = vpack.c.bf16 %v64, %v63
    %v72 = vpack.c.bf16 %v66, %v65
    %v73 = vpack.c.bf16 %v68, %v67
    %v74 = vpack.c.bf16 %v70, %v69
    %76 = vset.pattern.permute.xlu0 0
    %77 = vperm.xlu0 %76, %v45
    %v78 = vpop.permute.xlu0 %77
    %81 = vset.pattern.permute.xlu0 0
    %82 = vperm.xlu0 %81, %v46
    %v83 = vpop.permute.xlu0 %82
    %86 = vset.pattern.permute.xlu0 0
    %87 = vperm.xlu0 %86, %v47
    %v88 = vpop.permute.xlu0 %87
    %91 = vset.pattern.permute.xlu0 0
    %92 = vperm.xlu0 %91, %v48
    %v93 = vpop.permute.xlu0 %92
    %96 = vset.pattern.permute.xlu0 0
    %97 = vperm.xlu0 %96, %v49
    %v98 = vpop.permute.xlu0 %97
    %101 = vset.pattern.permute.xlu0 0
    %102 = vperm.xlu0 %101, %v50
    %v103 = vpop.permute.xlu0 %102
    %106 = vset.pattern.permute.xlu0 0
    %107 = vperm.xlu0 %106, %v51
    %v108 = vpop.permute.xlu0 %107
    %111 = vset.pattern.permute.xlu0 0
    %112 = vperm.xlu0 %111, %v52
    %v113 = vpop.permute.xlu0 %112
    %116 = vset.pattern.permute.xlu0 0
    %117 = vperm.xlu0 %116, %v53
    %v118 = vpop.permute.xlu0 %117
    %121 = vset.pattern.permute.xlu0 0
    %122 = vperm.xlu0 %121, %v54
    %v123 = vpop.permute.xlu0 %122
    %126 = vset.pattern.permute.xlu0 0
    %127 = vperm.xlu0 %126, %v55
    %v128 = vpop.permute.xlu0 %127
    %131 = vset.pattern.permute.xlu0 0
    %132 = vperm.xlu0 %131, %v56
    %v133 = vpop.permute.xlu0 %132
    %136 = vset.pattern.permute.xlu0 0
    %137 = vperm.xlu0 %136, %v57
    %v138 = vpop.permute.xlu0 %137
    %141 = vset.pattern.permute.xlu0 0
    %142 = vperm.xlu0 %141, %v58
    %v143 = vpop.permute.xlu0 %142
    %146 = vset.pattern.permute.xlu0 0
    %147 = vperm.xlu0 %146, %v59
    %v148 = vpop.permute.xlu0 %147
    %151 = vset.pattern.permute.xlu0 0
    %152 = vperm.xlu0 %151, %v60
    %v153 = vpop.permute.xlu0 %152
    %v171 = vunpack.c.l.b16 %v27
    %v172 = vunpack.c.l.b16 %v28
    %v173 = vunpack.c.l.b16 %v29
    %v174 = vunpack.c.l.b16 %v30
    %v175 = vunpack.c.l.b16 %v31
    %v176 = vunpack.c.l.b16 %v32
    %v177 = vunpack.c.l.b16 %v33
    %v178 = vunpack.c.l.b16 %v34
    %v179 = vunpack.c.l.b16 %v35
    %v180 = vunpack.c.l.b16 %v36
    %v181 = vunpack.c.l.b16 %v37
    %v182 = vunpack.c.l.b16 %v38
    %v183 = vunpack.c.l.b16 %v39
    %v184 = vunpack.c.l.b16 %v40
    %v185 = vunpack.c.l.b16 %v41
    %v186 = vunpack.c.l.b16 %v42
    %v187 = vpack.c.b16 %v172, %v171
    %v188 = vpack.c.b16 %v174, %v173
    %v189 = vpack.c.b16 %v176, %v175
    %v190 = vpack.c.b16 %v178, %v177
    %v191 = vpack.c.b16 %v180, %v179
    %v192 = vpack.c.b16 %v182, %v181
    %v193 = vpack.c.b16 %v184, %v183
    %v194 = vpack.c.b16 %v186, %v185
    %vm195 = vcmask 523264
    %v197 = vsel %vm195, %v187, 0
    %v200 = vsel %vm195, %v188, 0
    %v203 = vsel %vm195, %v189, 0
    %v206 = vsel %vm195, %v190, 0
    %v209 = vsel %vm195, %v191, 0
    %v212 = vsel %vm195, %v192, 0
    %v215 = vsel %vm195, %v193, 0
    %v218 = vsel %vm195, %v194, 0
    %220 = vmatpush.bf16.msra.mxu0 0
    %221 = vmatpush.bf16.msra.mxu0 0
    %222 = vmatpush.bf16.msra.mxu0 0
    %223 = vmatpush.bf16.msra.mxu0 0
    %224 = vmatpush.bf16.msra.mxu0 %v74
    %225 = vmatpush.bf16.msra.mxu0 %v73
    %226 = vmatpush.bf16.msra.mxu0 %v72
    %227 = vmatpush.bf16.msra.mxu0 %v71
    %228 = vmatmul.bf16.gmra.mxu0 %v197
    %v229 = vpop.f32.mrf.mxu0
    %v230 = vadd.f32 %v78, %v229
    %v231 = vpop.f32.mrf.mxu0
    %v232 = vadd.f32 %v83, %v231
    %233 = vmatmul.bf16.gmra.mxu0 %v200
    %v234 = vpop.f32.mrf.mxu0
    %v235 = vadd.f32 %v88, %v234
    %v236 = vpop.f32.mrf.mxu0
    %v237 = vadd.f32 %v93, %v236
    %238 = vmatmul.bf16.gmra.mxu0 %v203
    %v239 = vpop.f32.mrf.mxu0
    %v240 = vadd.f32 %v98, %v239
    %v241 = vpop.f32.mrf.mxu0
    %v242 = vadd.f32 %v103, %v241
    %243 = vmatmul.bf16.gmra.mxu0 %v206
    %v244 = vpop.f32.mrf.mxu0
    %v245 = vadd.f32 %v108, %v244
    %v246 = vpop.f32.mrf.mxu0
    %v247 = vadd.f32 %v113, %v246
    %248 = vmatmul.bf16.gmra.mxu0 %v209
    %v249 = vpop.f32.mrf.mxu0
    %v250 = vadd.f32 %v118, %v249
    %v251 = vpop.f32.mrf.mxu0
    %v252 = vadd.f32 %v123, %v251
    %253 = vmatmul.bf16.gmra.mxu0 %v212
    %v254 = vpop.f32.mrf.mxu0
    %v255 = vadd.f32 %v128, %v254
    %v256 = vpop.f32.mrf.mxu0
    %v257 = vadd.f32 %v133, %v256
    %258 = vmatmul.bf16.gmra.mxu0 %v215
    %v259 = vpop.f32.mrf.mxu0
    %v260 = vadd.f32 %v138, %v259
    %v261 = vpop.f32.mrf.mxu0
    %v262 = vadd.f32 %v143, %v261
    %263 = vmatmul.bf16.gmra.mxu0 %v218
    %v264 = vpop.f32.mrf.mxu0
    %v265 = vadd.f32 %v148, %v264
    %v266 = vpop.f32.mrf.mxu0
    %v267 = vadd.f32 %v153, %v266
    %268 = vdwg.mxu0
    %v269 = vmax.f32 %v230, 0.0
    %v270 = vmax.f32 %v232, 0.0
    %v271 = vmax.f32 %v235, 0.0
    %v272 = vmax.f32 %v237, 0.0
    %v273 = vmax.f32 %v240, 0.0
    %v274 = vmax.f32 %v242, 0.0
    %v275 = vmax.f32 %v245, 0.0
    %v276 = vmax.f32 %v247, 0.0
    %v277 = vmax.f32 %v250, 0.0
    %v278 = vmax.f32 %v252, 0.0
    %v279 = vmax.f32 %v255, 0.0
    %v280 = vmax.f32 %v257, 0.0
    %v281 = vmax.f32 %v260, 0.0
    %v282 = vmax.f32 %v262, 0.0
    %v283 = vmax.f32 %v265, 0.0
    %v284 = vmax.f32 %v267, 0.0
    %v285 = vpack.c.bf16 %v270, %v269
    %v286 = vpack.c.bf16 %v272, %v271
    %v287 = vpack.c.bf16 %v274, %v273
    %v288 = vpack.c.bf16 %v276, %v275
    %v289 = vpack.c.bf16 %v278, %v277
    %v290 = vpack.c.bf16 %v280, %v279
    %v291 = vpack.c.bf16 %v282, %v281
    %v292 = vpack.c.bf16 %v284, %v283
    %294 = vset.pattern.permute.xlu0 0
    %295 = vperm.xlu0 %294, %v61
    %v296 = vpop.permute.xlu0 %295
    %299 = vset.pattern.permute.xlu0 0
    %300 = vperm.xlu0 %299, %v62
    %v301 = vpop.permute.xlu0 %300
    %v305 = vunpack.c.l.b16 %v43
    %v306 = vunpack.c.l.b16 %v44
    %v307 = vpack.c.b16 %v306, %v305
    %309 = vmatpush.bf16.msra.mxu0 %v292
    %310 = vmatpush.bf16.msra.mxu0 %v291
    %311 = vmatpush.bf16.msra.mxu0 %v290
    %312 = vmatpush.bf16.msra.mxu0 %v289
    %313 = vmatpush.bf16.msra.mxu0 %v288
    %314 = vmatpush.bf16.msra.mxu0 %v287
    %315 = vmatpush.bf16.msra.mxu0 %v286
    %316 = vmatpush.bf16.msra.mxu0 %v285
    %317 = vmatmul.bf16.gmra.mxu0 %v307
    %v318 = vpop.f32.mrf.mxu0
    %v319 = vadd.f32 %v296, %v318
    %v320 = vpop.f32.mrf.mxu0
    %v321 = vadd.f32 %v301, %v320
    %322 = vdwg.mxu0
    %323 = vst [vmem:[%s5] sm:$0x7] %v319
    %324 = vst [vmem:[#allocation2 - $0x3] sm:$0x18] %v319
    %325 = vst [vmem:[#allocation4 - $0x5] sm:$0x20] %v319
    %326 = vst [vmem:[%s8 - $0x6] sm:$0xc0] %v319
    %327 = vst [vmem:[%s8 + $0x2] sm:$0x1] %v321
    %s328 = scalar_lea.vmem %s0, 64
    %v329 = vld [vmem:[%s328] sm:$0xff]
    %v330 = vld [vmem:[%s328 + $0x8] sm:$0xff]
    %v331 = vld [vmem:[%s328 + $0x10] sm:$0xff]
    %v332 = vld [vmem:[%s328 + $0x18] sm:$0xff]
    %v333 = vld [vmem:[%s328 + $0x20] sm:$0xff]
    %v334 = vld [vmem:[%s328 + $0x28] sm:$0xff]
    %v335 = vld [vmem:[%s328 + $0x30] sm:$0xff]
    %v336 = vld [vmem:[%s328 + $0x38] sm:$0xff]
    %v337 = vpack.c.bf16 %v330, %v329
    %v338 = vpack.c.bf16 %v332, %v331
    %v339 = vpack.c.bf16 %v334, %v333
    %v340 = vpack.c.bf16 %v336, %v335
    %341 = vmatpush.bf16.msra.mxu0 0
    %342 = vmatpush.bf16.msra.mxu0 0
    %343 = vmatpush.bf16.msra.mxu0 0
    %344 = vmatpush.bf16.msra.mxu0 0
    %345 = vmatpush.bf16.msra.mxu0 %v340
    %346 = vmatpush.bf16.msra.mxu0 %v339
    %347 = vmatpush.bf16.msra.mxu0 %v338
    %348 = vmatpush.bf16.msra.mxu0 %v337
    %349 = vmatmul.bf16.gmra.mxu0 %v197
    %v350 = vpop.f32.mrf.mxu0
    %v351 = vadd.f32 %v78, %v350
    %v352 = vpop.f32.mrf.mxu0
    %v353 = vadd.f32 %v83, %v352
    %354 = vmatmul.bf16.gmra.mxu0 %v200
    %v355 = vpop.f32.mrf.mxu0
    %v356 = vadd.f32 %v88, %v355
    %v357 = vpop.f32.mrf.mxu0
    %v358 = vadd.f32 %v93, %v357
    %359 = vmatmul.bf16.gmra.mxu0 %v203
    %v360 = vpop.f32.mrf.mxu0
    %v361 = vadd.f32 %v98, %v360
    %v362 = vpop.f32.mrf.mxu0
    %v363 = vadd.f32 %v103, %v362
    %364 = vmatmul.bf16.gmra.mxu0 %v206
    %v365 = vpop.f32.mrf.mxu0
    %v366 = vadd.f32 %v108, %v365
    %v367 = vpop.f32.mrf.mxu0
    %v368 = vadd.f32 %v113, %v367
    %369 = vmatmul.bf16.gmra.mxu0 %v209
    %v370 = vpop.f32.mrf.mxu0
    %v371 = vadd.f32 %v118, %v370
    %v372 = vpop.f32.mrf.mxu0
    %v373 = vadd.f32 %v123, %v372
    %374 = vmatmul.bf16.gmra.mxu0 %v212
    %v375 = vpop.f32.mrf.mxu0
    %v376 = vadd.f32 %v128, %v375
    %v377 = vpop.f32.mrf.mxu0
    %v378 = vadd.f32 %v133, %v377
    %379 = vmatmul.bf16.gmra.mxu0 %v215
    %v380 = vpop.f32.mrf.mxu0
    %v381 = vadd.f32 %v138, %v380
    %v382 = vpop.f32.mrf.mxu0
    %v383 = vadd.f32 %v143, %v382
    %384 = vmatmul.bf16.gmra.mxu0 %v218
    %v385 = vpop.f32.mrf.mxu0
    %v386 = vadd.f32 %v148, %v385
    %v387 = vpop.f32.mrf.mxu0
    %v388 = vadd.f32 %v153, %v387
    %389 = vdwg.mxu0
    %v390 = vmax.f32 %v351, 0.0
    %v391 = vmax.f32 %v353, 0.0
    %v392 = vmax.f32 %v356, 0.0
    %v393 = vmax.f32 %v358, 0.0
    %v394 = vmax.f32 %v361, 0.0
    %v395 = vmax.f32 %v363, 0.0
    %v396 = vmax.f32 %v366, 0.0
    %v397 = vmax.f32 %v368, 0.0
    %v398 = vmax.f32 %v371, 0.0
    %v399 = vmax.f32 %v373, 0.0
    %v400 = vmax.f32 %v376, 0.0
    %v401 = vmax.f32 %v378, 0.0
    %v402 = vmax.f32 %v381, 0.0
    %v403 = vmax.f32 %v383, 0.0
    %v404 = vmax.f32 %v386, 0.0
    %v405 = vmax.f32 %v388, 0.0
    %v406 = vpack.c.bf16 %v391, %v390
    %v407 = vpack.c.bf16 %v393, %v392
    %v408 = vpack.c.bf16 %v395, %v394
    %v409 = vpack.c.bf16 %v397, %v396
    %v410 = vpack.c.bf16 %v399, %v398
    %v411 = vpack.c.bf16 %v401, %v400
    %v412 = vpack.c.bf16 %v403, %v402
    %v413 = vpack.c.bf16 %v405, %v404
    %414 = vmatpush.bf16.msra.mxu0 %v413
    %415 = vmatpush.bf16.msra.mxu0 %v412
    %416 = vmatpush.bf16.msra.mxu0 %v411
    %417 = vmatpush.bf16.msra.mxu0 %v410
    %418 = vmatpush.bf16.msra.mxu0 %v409
    %419 = vmatpush.bf16.msra.mxu0 %v408
    %420 = vmatpush.bf16.msra.mxu0 %v407
    %421 = vmatpush.bf16.msra.mxu0 %v406
    %422 = vmatmul.bf16.gmra.mxu0 %v307
    %v423 = vpop.f32.mrf.mxu0
    %v424 = vadd.f32 %v296, %v423
    %v425 = vpop.f32.mrf.mxu0
    %v426 = vadd.f32 %v301, %v425
    %427 = vdwg.mxu0
    %s428 = scalar_lea.vmem %s5, 4
    %429 = vst [vmem:[%s428] sm:$0x7] %v424
    %s430 = scalar_lea.vmem [#allocation2], 2
    %431 = vst [vmem:[%s430 - $0x3] sm:$0x18] %v424
    %s432 = scalar_lea.vmem [#allocation4], 1
    %433 = vst [vmem:[%s432 - $0x5] sm:$0x20] %v424
    %s434 = scalar_lea.vmem %s8, 4
    %435 = vst [vmem:[%s434 - $0x6] sm:$0xc0] %v424
    %436 = vst [vmem:[%s434 + $0x2] sm:$0x1] %v426
    // Predicated region
    $region22: #{tpu_custom_call.1} parent=1 // pred_check
      _
    $region23: #{tpu_custom_call.1} parent=1 // pred_check_branch
      %438 = sbr.rel (0) target = $region25
    $region24: #{tpu_custom_call.1} parent=1 // pred_region
      _
    $region25: #{tpu_custom_call.1} parent=1 // pred_fallthru
      _
    // Predicated region
    $region26: #{tpu_custom_call.1} parent=1 // pred_check
      _
    $region27: #{tpu_custom_call.1} parent=1 // pred_check_branch
      %440 = sbr.rel (0) target = $region29
    $region28: #{tpu_custom_call.1} parent=1 // pred_region
      %442 = vsyncadd [#allocation3], 0
      %s443 = sshll.u32 [#allocation2], 4
      %s444 = int_to_ptr.vmem [resolvable:$true] %s443
      %s445 = sshll.u32 %s6, 4
      %s446 = int_to_ptr.hbm [resolvable:$true] %s445
      %451 = dma.vmem_to_hbm [thread:$0]  %s444, 64, %s446, [#allocation3], 32, 32, 2
    $region29: #{tpu_custom_call.1} parent=1 // pred_fallthru
      _
    // Predicated region
    $region30: #{tpu_custom_call.1} parent=1 // pred_check
      _
    $region31: #{tpu_custom_call.1} parent=1 // pred_check_branch
      %453 = sbr.rel (0) target = $region33
    $region32: #{tpu_custom_call.1} parent=1 // pred_region
      %455 = vsyncadd [#allocation5], 0
      %s456 = sshll.u32 [#allocation4], 4
      %s457 = int_to_ptr.vmem [resolvable:$true] %s456
      %s458 = sshll.u32 %s7, 4
      %s459 = int_to_ptr.hbm [resolvable:$true] %s458
      %464 = dma.vmem_to_hbm [thread:$0]  %s457, 32, %s459, [#allocation5], 16, 16, 1
    $region33: #{tpu_custom_call.1} parent=1 // pred_fallthru
      _
    // Predicated region
    $region34: #{tpu_custom_call.1} parent=1 // pred_check
      _
    $region35: #{tpu_custom_call.1} parent=1 // pred_check_branch
      %466 = sbr.rel (0) target = $region37
    $region36: #{tpu_custom_call.1} parent=1 // pred_region
      _
    $region37: #{tpu_custom_call.1} parent=1 // pred_fallthru
      _
    // Predicated region
    $region38: #{tpu_custom_call.1} parent=1 // pred_check
      _
    $region39: #{tpu_custom_call.1} parent=1 // pred_check_branch
      %468 = sbr.rel (0) target = $region41
    $region40: #{tpu_custom_call.1} parent=1 // pred_region
      _
    $region41: #{tpu_custom_call.1} parent=1 // pred_fallthru
      _
    // Predicated region
    $region42: #{tpu_custom_call.1} parent=1 // pred_check
      _
    $region43: #{tpu_custom_call.1} parent=1 // pred_check_branch
      %470 = sbr.rel (0) target = $region45
    $region44: #{tpu_custom_call.1} parent=1 // pred_region
      %472 = dma.done [#allocation3], 64
    $region45: #{tpu_custom_call.1} parent=1 // pred_fallthru
      _
    // Predicated region
    $region46: #{tpu_custom_call.1} parent=1 // pred_check
      _
    $region47: #{tpu_custom_call.1} parent=1 // pred_check_branch
      %474 = sbr.rel (0) target = $region49
    $region48: #{tpu_custom_call.1} parent=1 // pred_region
      %476 = dma.done [#allocation5], 32
    $region49: #{tpu_custom_call.1} parent=1 // pred_fallthru
      _
    // Predicated region
    $region50: #{tpu_custom_call.1} parent=1 // pred_check
      _
    $region51: #{tpu_custom_call.1} parent=1 // pred_check_branch
      %478 = sbr.rel (0) target = $region53
    $region52: #{tpu_custom_call.1} parent=1 // pred_region
      _
    $region53: #{tpu_custom_call.1} parent=1 // pred_fallthru
      _
    %479 = vsyncpa [#allocation3], 1
    %480 = vsyncpa [#allocation5], 1

</llo_original>
